<compile_context>
chip_gen: v5e
topology: v5e:2x2
jax: 0.10.0
libtpu: 0.0.40
codegen_flags: <defaults>
</compile_context>

<pallas_src>
import math

import jax
import jax.numpy as jnp
from jax.experimental import pallas as pl
from jax.experimental.pallas import tpu as pltpu

INF = 1e+20


# ---------------------------------------------------------------------------
# Small helpers
# ---------------------------------------------------------------------------

def _round_up(x, m):
    return (x + m - 1) // m * m


def _vmem_capacity_bytes():
    """Physical VMEM per core; fall back to the smallest current generation (v7x)."""
    try:
        return int(pltpu.get_tpu_info().vmem_capacity_bytes)
    except Exception:
        return 64 * 1024 * 1024


def _mxu_prefers_bf16():
    """bf16 matmul/tanh helps on v6e/v7x (bf16-native MXU/EUP); not on <= v5."""
    try:
        kind = jax.devices()[0].device_kind.lower()
    except Exception:
        return True
    return not any(tag in kind for tag in ('v2', 'v3', 'v4', 'v5'))


# ---------------------------------------------------------------------------
# Kernels: each computes one (Bt, St) tile of the attention-score matrix.
# ---------------------------------------------------------------------------

def _apply_mask_and_store(att, mask_ref, out_ref):
    if mask_ref is not None:
        m = mask_ref[...].astype(jnp.float32)
        # exact module semantics (mask may be non-binary / soft)
        att = m * att - (1.0 - m) * INF
    out_ref[...] = att.astype(out_ref.dtype)


def _dot_score_body(mem_ref, p_ref, mask_ref, out_ref):
    # mem: [Bt, St, K], p: [Bt, K]  ->  att[b, s] = <mem[b, s, :], p[b, :]>
    mem = mem_ref[...].astype(jnp.float32)
    p = p_ref[...].astype(jnp.float32)
    # TODO(synk): on v7x, if `mem` is reused across many queries (decode loop),
    # pre-transpose it once to [B, K, S] and accumulate over K on the VPU
    # (lane axis = S) so the XLU lane reduce below can't become the binding unit.
    att = jnp.sum(mem * p[:, None, :], axis=-1)          # VPU mul + XLU lane reduce
    _apply_mask_and_store(att, mask_ref, out_ref)


def _make_dot_score_kernel(masked):
    if masked:
        def kernel(mem_ref, p_ref, mask_ref, out_ref):
            _dot_score_body(mem_ref, p_ref, mask_ref, out_ref)
    else:
        def kernel(mem_ref, p_ref, out_ref):
            _dot_score_body(mem_ref, p_ref, None, out_ref)
    return kernel


def _add_score_body(mem_ref, p_ref, w2_ref, w3_ref, mask_ref, out_ref, use_bf16):
    # mem: [Bt, St, Dm], p = q@W: [Bt, H], W2: [Dm, H], W3 row: [1, H]
    Bt, St, Dm = mem_ref.shape
    cdt = jnp.bfloat16 if use_bf16 else jnp.float32
    mem = mem_ref[...].astype(cdt)
    w2 = w2_ref[...].astype(cdt)
    # One tall-skinny MXU matmul over the flattened (batch*time) axis, f32 acc.
    # The leading-dim collapse preserves the (sublane, lane) tiling (St is a
    # multiple of 128), so the reshape is a free relayout, not a VMEM copy.
    mw = jnp.dot(mem.reshape(Bt * St, Dm), w2,
                 preferred_element_type=jnp.float32).reshape(Bt, St, -1)
    x = mw + p_ref[...].astype(jnp.float32)[:, None, :]
    if use_bf16:
        t = jnp.tanh(x.astype(jnp.bfloat16)).astype(jnp.float32)   # bf16 EUP ~2x rate
    else:
        t = jnp.tanh(x)                                            # f32 EUP (v5e path)
    w3 = w3_ref[...].astype(jnp.float32)                           # [1, H] lane-dense
    att = jnp.sum(t * w3[None, :, :], axis=-1)                     # [Bt, St]
    _apply_mask_and_store(att, mask_ref, out_ref)


def _make_add_score_kernel(masked, use_bf16):
    if masked:
        def kernel(mem_ref, p_ref, w2_ref, w3_ref, mask_ref, out_ref):
            _add_score_body(mem_ref, p_ref, w2_ref, w3_ref, mask_ref, out_ref, use_bf16)
    else:
        def kernel(mem_ref, p_ref, w2_ref, w3_ref, out_ref):
            _add_score_body(mem_ref, p_ref, w2_ref, w3_ref, None, out_ref, use_bf16)
    return kernel


# ---------------------------------------------------------------------------
# Tile selection
# ---------------------------------------------------------------------------

def _pick_seq_tile(S, max_tile, n_batch_tiles):
    """Sequence tile St (multiple of 128, or S itself for S < 128) + padded S."""
    if S < 128:
        return S, S                      # full (unblocked) axis -- legal block shape
    St = max(128, min(max_tile, _round_up(S, 128)))

    def _ok(t):
        s_pad = _round_up(S, t)
        waste_ok = (s_pad - S) <= max(128, S // 8)                  # bound padded work
        steps_ok = (t == 128) or n_batch_tiles * (s_pad // t) >= 4  # megacore/pipeline
        return waste_ok and steps_ok

    while St > 128 and not _ok(St):
        St -= 128
    return St, _round_up(S, St)


# ---------------------------------------------------------------------------
# Wrapper
# ---------------------------------------------------------------------------

def attention_forward(query_embed, in_memory_embed, params=None, atten_mask=None,
                      atten_type='simple'):
    """query_embed: [B, Dq], in_memory_embed: [B, S, D], atten_mask: [B, S] or None.
    Returns the [B, S] (pre-softmax) attention scores, matching the PyTorch module."""
    B, S, D = in_memory_embed.shape
    masked = atten_mask is not None
    use_bf16 = _mxu_prefers_bf16()

    # --- hoist the query projection (one XLA GEMM per call) -------------------
    if atten_type == 'simple':
        assert query_embed.shape[-1] == D, (query_embed.shape, D)
        p = query_embed
        H = D
    elif atten_type == 'mul':
        W = params['W']
        H = W.shape[1]
        assert query_embed.shape[-1] == W.shape[0]
        assert D == H, ('mul attention requires mem last dim == W output dim', D, H)
        p = jnp.dot(query_embed, W).astype(jnp.float32)
    elif atten_type == 'add':
        W, W2, W3 = params['W'], params['W2'], params['W3']
        H = W.shape[1]
        assert query_embed.shape[-1] == W.shape[0]
        assert W2.shape == (D, H) and W3.shape[0] == H
        p = jnp.dot(query_embed, W).astype(jnp.float32)
    else:
        raise RuntimeError('Unknown atten_type: {}'.format(atten_type))

    # --- generation-aware VMEM budget & tile sizes -----------------------------
    mem_isz = in_memory_embed.dtype.itemsize
    if atten_type == 'add':
        cisz = 2 if use_bf16 else 4
        # mem double-buffered + compute-dtype copy + mw/t f32 temps + tanh temp + out/mask
        per_elem = 2 * D * mem_isz + D * cisz + 2 * H * 4 + H * 2 + 24
    else:
        per_elem = 2 * D * mem_isz + 2 * D * 4 + 24

    vmem_cap = _vmem_capacity_bytes()               # 64 MiB (v7x) / 128 MiB (v5e, v6e)
    vmem_limit = int(vmem_cap * 0.75)               # 48 MiB / 96 MiB
    budget = vmem_limit // 3                        # headroom for pipeline + compiler

    # batch tile: multiple of 8 (or the full batch); pad batch only if an
    # unblocked batch tile could not fit the budget even at St=128.
    st_floor = 128 if S >= 128 else S
    if B % 8 == 0:
        Bt, B_pad = 8, B
    elif B * st_floor * per_elem <= budget:
        Bt, B_pad = B, B
    else:
        B_pad, Bt = _round_up(B, 8), 8

    # sequence tile: as large as the budget allows (<= 4096), multiple of 128.
    if S >= 128:
        max_st = max(128, min(4096, (budget // max(1, Bt * per_elem)) // 128 * 128))
    else:
        max_st = S
    St, S_pad = _pick_seq_tile(S, max_st, B_pad // Bt)

    # grow the batch tile for short sequences / large batches (tiles stay big,
    # but keep >= 4 parallel grid steps for megacore sharding on v7x).
    while (B_pad % (Bt * 2) == 0 and Bt * 2 <= 64
           and (Bt * 2) * St * per_elem <= budget
           and (B_pad // (Bt * 2)) * (S_pad // St) >= 4):
        Bt *= 2

    # --- pad operands (padded scores are sliced off / masked, so it is safe) ---
    mem = in_memory_embed
    mask = atten_mask
    if S_pad != S:
        mem = jnp.pad(mem, ((0, 0), (0, S_pad - S), (0, 0)))
        if masked:
            mask = jnp.pad(mask, ((0, 0), (0, S_pad - S)))
    if B_pad != B:
        mem = jnp.pad(mem, ((0, B_pad - B), (0, 0), (0, 0)))
        p = jnp.pad(p, ((0, B_pad - B), (0, 0)))
        if masked:
            mask = jnp.pad(mask, ((0, B_pad - B), (0, 0)))

    grid = (B_pad // Bt, S_pad // St)
    K = p.shape[-1]

    mem_spec = pl.BlockSpec((Bt, St, D), lambda b, s: (b, s, 0))
    p_spec = pl.BlockSpec((Bt, K), lambda b, s: (b, 0))
    mask_spec = pl.BlockSpec((Bt, St), lambda b, s: (b, s))
    out_spec = pl.BlockSpec((Bt, St), lambda b, s: (b, s))

    def const_spec(arr):  # weights: same block every grid step -> stay VMEM-resident
        return pl.BlockSpec(arr.shape, lambda b, s, _n=arr.ndim: (0,) * _n)

    if atten_type in ('simple', 'mul'):
        kernel = _make_dot_score_kernel(masked)
        operands = [mem, p] + ([mask] if masked else [])
        in_specs = [mem_spec, p_spec] + ([mask_spec] if masked else [])
        flops = 2 * B_pad * S_pad * D + (3 * B_pad * S_pad if masked else 0)
        transc = 0
        bytes_acc = (mem_isz * B_pad * S_pad * D + 4 * B_pad * K
                     + 4 * B_pad * S_pad * (2 if masked else 1))
    else:  # 'add'
        w2_op = W2.astype(jnp.bfloat16) if use_bf16 else W2.astype(jnp.float32)
        w3_row = W3.reshape(1, H).astype(jnp.float32)   # lane-dense row, not [H,1] col
        kernel = _make_add_score_kernel(masked, use_bf16)
        operands = [mem, p, w2_op, w3_row] + ([mask] if masked else [])
        in_specs = [mem_spec, p_spec, const_spec(w2_op), const_spec(w3_row)] + \
                   ([mask_spec] if masked else [])
        flops = (2 * B_pad * S_pad * D * H + 4 * B_pad * S_pad * H
                 + (3 * B_pad * S_pad if masked else 0))
        transc = B_pad * S_pad * H
        bytes_acc = (mem_isz * B_pad * S_pad * D + 4 * B_pad * K
                     + w2_op.size * w2_op.dtype.itemsize + 4 * H
                     + 4 * B_pad * S_pad * (2 if masked else 1))

    out = pl.pallas_call(
        kernel,
        out_shape=jax.ShapeDtypeStruct((B_pad, S_pad), jnp.float32),
        grid=grid,
        in_specs=in_specs,
        out_specs=out_spec,
        compiler_params=pltpu.CompilerParams(
            dimension_semantics=("parallel", "parallel"),
            vmem_limit_bytes=vmem_limit),
        cost_estimate=pl.CostEstimate(
            flops=int(flops), transcendentals=int(transc),
            bytes_accessed=int(bytes_acc)),
    )(*operands)

    if B_pad != B or S_pad != S:
        out = out[:B, :S]
    return out


# ---------------------------------------------------------------------------
# Params (xavier_uniform, like the PyTorch module) and pure-JAX reference.
# ---------------------------------------------------------------------------

def _xavier_uniform(key, shape):
    bound = math.sqrt(6.0 / (shape[0] + shape[1]))
    return jax.random.uniform(key, shape, jnp.float32, -bound, bound)


def init_params(key, hidden_size, h_state_embed_size, in_memory_embed_size):
    k1, k2, k3 = jax.random.split(key, 3)
    return {
        'W':  _xavier_uniform(k1, (h_state_embed_size, hidden_size)),
        'W2': _xavier_uniform(k2, (in_memory_embed_size, hidden_size)),
        'W3': _xavier_uniform(k3, (hidden_size, 1)),
    }


def _reference_forward(query_embed, in_memory_embed, params, atten_mask=None,
                       atten_type='simple'):
    if atten_type == 'simple':
        att = jnp.einsum('bsd,bd->bs', in_memory_embed, query_embed)
    elif atten_type == 'mul':
        att = jnp.einsum('bsh,bh->bs', in_memory_embed, query_embed @ params['W'])
    elif atten_type == 'add':
        t = jnp.tanh(jnp.einsum('bsd,dh->bsh', in_memory_embed, params['W2'])
                     + (query_embed @ params['W'])[:, None, :])
        att = jnp.einsum('bsh,h->bs', t, params['W3'][:, 0])
    else:
        raise RuntimeError(atten_type)
    if atten_mask is not None:
        att = atten_mask * att - (1.0 - atten_mask) * INF
    return att


if __name__ == "__main__":
    B, S = 2, 256
    hidden_size = 64
    h_state_embed_size = 64
    in_memory_embed_size = 64  # == hidden_size so the same tensors exercise all 3 paths

    key = jax.random.PRNGKey(0)
    kp, kq, km, kmask, km2, kmask2 = jax.random.split(key, 6)
    params = init_params(kp, hidden_size, h_state_embed_size, in_memory_embed_size)
    query = jax.random.normal(kq, (B, h_state_embed_size), jnp.float32)
    memory = jax.random.normal(km, (B, S, in_memory_embed_size), jnp.float32)
    mask = (jax.random.uniform(kmask, (B, S)) > 0.3).astype(jnp.float32)

    use_bf16 = _mxu_prefers_bf16()

    for atype in ('simple', 'mul', 'add'):
        for m in (None, mask):
            out = jax.block_until_ready(
                attention_forward(query, memory, params, atten_mask=m, atten_type=atype))
            ref = jax.block_until_ready(
                _reference_forward(query, memory, params, atten_mask=m, atten_type=atype))
            assert out.shape == (B, S), out.shape
            # 'add' uses bf16 MXU/tanh on v6e/v7x -> loosen the tolerance there.
            tol = 1e-1 if (atype == 'add' and use_bf16) else 1e-4
            assert jnp.allclose(out, ref, rtol=tol, atol=tol), \
                (atype, m is not None, float(jnp.max(jnp.abs(out - ref))))

    # Ragged (non-128-multiple) sequence length: exercises the pad-and-slice path.
    S2 = 200
    memory2 = jax.random.normal(km2, (B, S2, in_memory_embed_size), jnp.float32)
    mask2 = (jax.random.uniform(kmask2, (B, S2)) > 0.3).astype(jnp.float32)
    out = jax.block_until_ready(
        attention_forward(query, memory2, params, atten_mask=mask2, atten_type='simple'))
    ref = _reference_forward(query, memory2, params, atten_mask=mask2, atten_type='simple')
    assert out.shape == (B, S2), out.shape
    assert jnp.allclose(out, ref, rtol=1e-4, atol=1e-4), \
        float(jnp.max(jnp.abs(out - ref)))

    print("KERNEL_OK")
</pallas_src>

<mosaic_0001>
module attributes {stable_mosaic.version = 11 : i64} {
  func.func @kernel(%arg0: i32, %arg1: i32, %arg2: memref<2x128x64xf32, #tpu.memory_space<vmem>>, %arg3: memref<2x64xf32, #tpu.memory_space<vmem>>, %arg4: memref<2x128xf32, #tpu.memory_space<vmem>>) attributes {dimension_semantics = [#tpu.dimension_semantics<parallel>, #tpu.dimension_semantics<parallel>], iteration_bounds = array<i64: 1, 2>, scalar_prefetch = 0 : i64, scratch_operands = 0 : i64, tpu.core_type = #tpu.core_type<tc>, window_params = [{transform_indices = @transform_0, window_bounds = array<i64: 2, 128, 64>}, {transform_indices = @transform_1, window_bounds = array<i64: 2, 64>}, {transform_indices = @transform_2, window_bounds = array<i64: 2, 128>}]} {
    %c0 = arith.constant 0 : index
    %c0_0 = arith.constant 0 : index
    %c0_1 = arith.constant 0 : index
    %0 = vector.load %arg2[%c0, %c0_0, %c0_1] : memref<2x128x64xf32, #tpu.memory_space<vmem>>, vector<2x128x64xf32>
    %c0_2 = arith.constant 0 : index
    %c0_3 = arith.constant 0 : index
    %1 = vector.load %arg3[%c0_2, %c0_3] : memref<2x64xf32, #tpu.memory_space<vmem>>, vector<2x64xf32>
    %2 = vector.shape_cast %1 : vector<2x64xf32> to vector<2x1x64xf32>
    %3 = vector.broadcast %2 : vector<2x1x64xf32> to vector<2x128x64xf32>
    %4 = arith.mulf %0, %3 : vector<2x128x64xf32>
    %cst = arith.constant dense<0.000000e+00> : vector<2x128xf32>
    %5 = vector.multi_reduction <add>, %4, %cst [2] : vector<2x128x64xf32> to vector<2x128xf32>
    %c0_4 = arith.constant 0 : index
    %c0_5 = arith.constant 0 : index
    %6 = vector.load %arg4[%c0_4, %c0_5] : memref<2x128xf32, #tpu.memory_space<vmem>>, vector<2x128xf32>
    tpu.vector_store %arg4[%c0_4, %c0_5], %5 {strides = array<i32>} : memref<2x128xf32, #tpu.memory_space<vmem>>, vector<2x128xf32>,
    return
  }
  func.func @transform_0(%arg0: i32, %arg1: i32) -> (i32, i32, i32) {
    %c0_i32 = arith.constant 0 : i32
    %c0_i32_0 = arith.constant 0 : i32
    return %arg0, %arg1, %c0_i32 : i32, i32, i32
  }
  func.func @transform_1(%arg0: i32, %arg1: i32) -> (i32, i32) {
    %c0_i32 = arith.constant 0 : i32
    %c0_i32_0 = arith.constant 0 : i32
    return %arg0, %c0_i32 : i32, i32
  }
  func.func @transform_2(%arg0: i32, %arg1: i32) -> (i32, i32) {
    %c0_i32 = arith.constant 0 : i32
    return %arg0, %arg1 : i32, i32
  }
}

</mosaic_0001>

<llo_original>
// kernel: tpu_custom_call.1
$region0: #{tpu_custom_call.1}
  #allocation0 [shape = 'u32[]', space=smem, size = 0x4, offset = 0x4, fixed_abs, tag = 'smem constant byte address 0x4 - core index']
  #allocation1 [shape = 'u32[72,128]{1,0:T(1,128)}', space=vmem, size = 0x9000, scoped, tag = 'internal scratch']
  %s0 = inlined_call_operand.vmem [shape: f32[2,256,64], index: 0, kind: input, shape index: {}]
  %s1 = inlined_call_operand.vmem [shape: f32[2,64], index: 1, kind: input, shape index: {}]
  %s2 = inlined_call_operand.hbm [shape: f32[2,256], index: 2, kind: output, shape index: {}]
  %s3 = sld [smem:[#allocation0]]
  $region79: #{tpu_custom_call.1} parent=0
    _
  %s5 = ssub.s32 1, %s3
  %s6 = scalar_select 0, %s5, %s3
  $region1: #{tpu_custom_call.1} parent=0
    #allocation2 [shape = 'u8[262144]{0}', space=vmem, size = 0x40000, scoped, tag = 'input window, operand 0']
    #allocation3 [shape = 'u8[2048]{0}', space=vmem, size = 0x800, scoped, tag = 'output window, operand 0']
    #allocation4 [shape = 's32[2]{0}', space=sflag, size = 0x8, scoped, tag = 'scoped memory for tpu_custom_call.1']
    %7 = vsyncpa [#allocation4], 0
    %s8 = scalar_lea.sflag [#allocation4], 1
    %9 = vsyncpa %s8, 0
    loop: start=0, step=1, limit=4
    $region2: #{tpu_custom_call.1} parent=1 // loop_pre_header
      _
    $region3: #{tpu_custom_call.1} parent=1 // loop_header
      %s11 = sphi 0, %s15
      %p12 = scmp.ge.s32.totalorder %s11, 4
      %s18 = sphi 0, %s30
      %s19 = sphi 0, %s26
      %s20 = sphi 0, %s18
      %s21 = sphi 0, %s19
      %s22 = sphi 0, %s20
      %s23 = sphi 0, %s21
      %s35 = sphi 0, %s37
      %s38 = sphi 0, %s35
      %s39 = sphi 0, %s38
      %s55 = sphi 0, %s39
      %s61 = sphi 0, %s63
      %s64 = sphi 0, %s61
      %s65 = sphi 0, %s64
      %s81 = sphi 0, %s65
      %s89 = sphi 0, %s91
      %s92 = sphi 0, %s89
      %s93 = sphi 0, %s92
      %s109 = sphi 0, %s93
    $region4: #{tpu_custom_call.1} parent=1 // loop_header_branch
      %14 = sbr.rel (%p12) target = $region8
    $region5: #{tpu_custom_call.1} parent=1 // loop_body
      %s16 = ssub.s32 %s11, 1
      %s17 = ssub.s32 %s11, 2
      %s24 = sadd.s32 1, %s19
      %p25 = scmp.ge.s32.totalorder %s24, 2
      %s26 = scalar_select %p25, 0, %s24
      %s27 = sadd.s32 1, %s18
      %s28 = scalar_select %p25, %s27, %s18
      %p29 = scmp.ge.s32.totalorder %s28, 1
      %s30 = scalar_select %p29, 0, %s28
      %s31 = ssub.s32 %s18, %s30
      %s32 = ssub.s32 %s19, %s26
      %s33 = sor.u32 %s31, %s32
      %p34 = scmp.eq.s32.totalorder %s33, 0
      %s36 = sadd.s32 %s35, 1
      %s37 = scalar_select %p34, %s35, %s36
      %p40 = pneg %p34
      %p41 = scmp.eq.s32.totalorder %s11, 1
      %p42 = por %p40, %p41
      %p43 = scmp.ne.s32.totalorder %s35, %s38
      %p44 = scmp.eq.s32.totalorder %s11, 0
      %p45 = por %p43, %p44
      %p46 = scmp.ne.s32.totalorder %s35, %s38
      %p47 = scmp.eq.s32.totalorder %s16, 1
      %p48 = por %p46, %p47
      %p49 = scmp.ne.s32.totalorder %s38, %s39
      %p50 = scmp.eq.s32.totalorder %s16, 0
      %p51 = por %p49, %p50
      %p52 = scmp.ne.s32.totalorder %s38, %s39
      %p53 = scmp.eq.s32.totalorder %s17, 1
      %p54 = por %p52, %p53
      %p56 = scmp.ne.s32.totalorder %s39, %s55
      %p57 = scmp.eq.s32.totalorder %s17, 0
      %p58 = por %p56, %p57
      %s59 = ssub.s32 %s18, %s30
      %p60 = scmp.eq.s32.totalorder %s59, 0
      %s62 = sadd.s32 %s61, 1
      %s63 = scalar_select %p60, %s61, %s62
      %p66 = pneg %p60
      %p67 = scmp.eq.s32.totalorder %s11, 1
      %p68 = por %p66, %p67
      %p69 = scmp.ne.s32.totalorder %s61, %s64
      %p70 = scmp.eq.s32.totalorder %s11, 0
      %p71 = por %p69, %p70
      %p72 = scmp.ne.s32.totalorder %s61, %s64
      %p73 = scmp.eq.s32.totalorder %s16, 1
      %p74 = por %p72, %p73
      %p75 = scmp.ne.s32.totalorder %s64, %s65
      %p76 = scmp.eq.s32.totalorder %s16, 0
      %p77 = por %p75, %p76
      %p78 = scmp.ne.s32.totalorder %s64, %s65
      %p79 = scmp.eq.s32.totalorder %s17, 1
      %p80 = por %p78, %p79
      %p82 = scmp.ne.s32.totalorder %s65, %s81
      %p83 = scmp.eq.s32.totalorder %s17, 0
      %p84 = por %p82, %p83
      %s85 = ssub.s32 %s18, %s30
      %s86 = ssub.s32 %s19, %s26
      %s87 = sor.u32 %s85, %s86
      %p88 = scmp.eq.s32.totalorder %s87, 0
      %s90 = sadd.s32 %s89, 1
      %s91 = scalar_select %p88, %s89, %s90
      %p94 = pneg %p88
      %p95 = scmp.eq.s32.totalorder %s11, 1
      %p96 = por %p94, %p95
      %p97 = scmp.ne.s32.totalorder %s89, %s92
      %p98 = scmp.eq.s32.totalorder %s11, 0
      %p99 = por %p97, %p98
      %p100 = scmp.ne.s32.totalorder %s89, %s92
      %p101 = scmp.eq.s32.totalorder %s16, 1
      %p102 = por %p100, %p101
      %p103 = scmp.ne.s32.totalorder %s92, %s93
      %p104 = scmp.eq.s32.totalorder %s16, 0
      %p105 = por %p103, %p104
      %p106 = scmp.ne.s32.totalorder %s92, %s93
      %p107 = scmp.eq.s32.totalorder %s17, 1
      %p108 = por %p106, %p107
      %p110 = scmp.ne.s32.totalorder %s93, %s109
      %p111 = scmp.eq.s32.totalorder %s17, 0
      %p112 = por %p110, %p111
      %p113 = scmp.le.s32.totalorder 1, %s11
      %p114 = scmp.lt.s32.totalorder %s11, 3
      %p115 = pnand %p113, %p114
      %p116 = pneg %p115
      // Predicated region
      $region9: #{tpu_custom_call.1} parent=5 // pred_check
        _
      $region10: #{tpu_custom_call.1} parent=5 // pred_check_branch
        %118 = sbr.rel (%p115) target = $region12
      $region11: #{tpu_custom_call.1} parent=5 // pred_region
        %s119 = ssub.s32 %s11, 1
        // Predicated region
        $region13: #{tpu_custom_call.1} parent=11 // pred_check
          %p120 = pneg %p77
        $region14: #{tpu_custom_call.1} parent=11 // pred_check_branch
          %122 = sbr.rel (%p120) target = $region16
        $region15: #{tpu_custom_call.1} parent=11 // pred_region
          %p123 = scmp.lt.s32.totalorder %s20, 0
          %s124 = scalar_select %p123, %s20, 0
          %s125 = smul.addr %s124, 2
          %s126 = scalar_lea.vmem %s1, %s125
        $region16: #{tpu_custom_call.1} parent=11 // pred_fallthru
          _
      $region12: #{tpu_custom_call.1} parent=5 // pred_fallthru
        _
      %p127 = scmp.lt.s32.totalorder %s11, 2
      // Predicated region
      $region17: #{tpu_custom_call.1} parent=5 // pred_check
        %p128 = pneg %p127
      $region18: #{tpu_custom_call.1} parent=5 // pred_check_branch
        %130 = sbr.rel (%p128) target = $region20
      $region19: #{tpu_custom_call.1} parent=5 // pred_region
        // Predicated region
        $region21: #{tpu_custom_call.1} parent=19 // pred_check
          %p131 = pneg %p45
        $region22: #{tpu_custom_call.1} parent=19 // pred_check_branch
          %133 = sbr.rel (%p131) target = $region24
        $region23: #{tpu_custom_call.1} parent=19 // pred_region
          %s134 = sand.u32 %s35, 1
          %s135 = sand.u32 %s35, 1
          %s136 = smul.addr %s135, 256
          %s137 = scalar_lea.vmem [#allocation2], %s136
          %s138 = smul.u32 2, %s18
          %s139 = smul.u32 16, %s19
          %s140 = smul.addr %s138, 32
          %s141 = sadd.s32 %s139, %s140
          %s142 = smul.addr %s141, 8
          %s143 = scalar_lea.vmem %s0, %s142
          // Predicated region
          $region25: #{tpu_custom_call.1} parent=23 // pred_check
            _
          $region26: #{tpu_custom_call.1} parent=23 // pred_check_branch
            %145 = sbr.rel (0) target = $region28
          $region27: #{tpu_custom_call.1} parent=23 // pred_region
            // Predicated region
            $region29: #{tpu_custom_call.1} parent=27 // pred_check
              _
            $region30: #{tpu_custom_call.1} parent=27 // pred_check_branch
              %147 = sbr.rel (0) target = $region32
            $region31: #{tpu_custom_call.1} parent=27 // pred_region
              // Predicated region
              $region44: #{tpu_custom_call.1} parent=31 // pred_check
                _
              $region45: #{tpu_custom_call.1} parent=31 // pred_check_branch
                %225 = sbr.rel (0) target = $region47
              $region46: #{tpu_custom_call.1} parent=31 // pred_region
                loop: start=0, step=1, limit=1
                $region48: #{tpu_custom_call.1} parent=46 // loop_pre_header
                  _
                $region49: #{tpu_custom_call.1} parent=46 // loop_header
                  %s227 = sphi 0, %s231
                  %p228 = scmp.ge.s32.totalorder %s227, 1
                  %s232 = sphi %s143, %s143
                  %s233 = sphi %s137, %s137
                $region50: #{tpu_custom_call.1} parent=46 // loop_header_branch
                  %230 = sbr.rel (%p228) target = $region54
                $region51: #{tpu_custom_call.1} parent=46 // loop_body
                  %v234 = vld [vmem:[%s232] sm:$0xff]
                  %235 = vst [vmem:[%s233] sm:$0xff] %v234
                  %v236 = vld [vmem:[%s232 + $0x8] sm:$0xff]
                  %237 = vst [vmem:[%s233 + $0x8] sm:$0xff] %v236
                  %v238 = vld [vmem:[%s232 + $0x10] sm:$0xff]
                  %239 = vst [vmem:[%s233 + $0x10] sm:$0xff] %v238
                  %v240 = vld [vmem:[%s232 + $0x18] sm:$0xff]
                  %241 = vst [vmem:[%s233 + $0x18] sm:$0xff] %v240
                  %v242 = vld [vmem:[%s232 + $0x20] sm:$0xff]
                  %243 = vst [vmem:[%s233 + $0x20] sm:$0xff] %v242
                  %v244 = vld [vmem:[%s232 + $0x28] sm:$0xff]
                  %245 = vst [vmem:[%s233 + $0x28] sm:$0xff] %v244
                  %v246 = vld [vmem:[%s232 + $0x30] sm:$0xff]
                  %247 = vst [vmem:[%s233 + $0x30] sm:$0xff] %v246
                  %v248 = vld [vmem:[%s232 + $0x38] sm:$0xff]
                  %249 = vst [vmem:[%s233 + $0x38] sm:$0xff] %v248
                  %v250 = vld [vmem:[%s232 + $0x40] sm:$0xff]
                  %251 = vst [vmem:[%s233 + $0x40] sm:$0xff] %v250
                  %v252 = vld [vmem:[%s232 + $0x48] sm:$0xff]
                  %253 = vst [vmem:[%s233 + $0x48] sm:$0xff] %v252
                  %v254 = vld [vmem:[%s232 + $0x50] sm:$0xff]
                  %255 = vst [vmem:[%s233 + $0x50] sm:$0xff] %v254
                  %v256 = vld [vmem:[%s232 + $0x58] sm:$0xff]
                  %257 = vst [vmem:[%s233 + $0x58] sm:$0xff] %v256
                  %v258 = vld [vmem:[%s232 + $0x60] sm:$0xff]
                  %259 = vst [vmem:[%s233 + $0x60] sm:$0xff] %v258
                  %v260 = vld [vmem:[%s232 + $0x68] sm:$0xff]
                  %261 = vst [vmem:[%s233 + $0x68] sm:$0xff] %v260
                  %v262 = vld [vmem:[%s232 + $0x70] sm:$0xff]
                  %263 = vst [vmem:[%s233 + $0x70] sm:$0xff] %v262
                  %v264 = vld [vmem:[%s232 + $0x78] sm:$0xff]
                  %265 = vst [vmem:[%s233 + $0x78] sm:$0xff] %v264
                  %v266 = vld [vmem:[%s232 + $0x100] sm:$0xff]
                  %267 = vst [vmem:[%s233 + $0x80] sm:$0xff] %v266
                  %v268 = vld [vmem:[%s232 + $0x108] sm:$0xff]
                  %269 = vst [vmem:[%s233 + $0x88] sm:$0xff] %v268
                  %v270 = vld [vmem:[%s232 + $0x110] sm:$0xff]
                  %271 = vst [vmem:[%s233 + $0x90] sm:$0xff] %v270
                  %v272 = vld [vmem:[%s232 + $0x118] sm:$0xff]
                  %273 = vst [vmem:[%s233 + $0x98] sm:$0xff] %v272
                  %v274 = vld [vmem:[%s232 + $0x120] sm:$0xff]
                  %275 = vst [vmem:[%s233 + $0xa0] sm:$0xff] %v274
                  %v276 = vld [vmem:[%s232 + $0x128] sm:$0xff]
                  %277 = vst [vmem:[%s233 + $0xa8] sm:$0xff] %v276
                  %v278 = vld [vmem:[%s232 + $0x130] sm:$0xff]
                  %279 = vst [vmem:[%s233 + $0xb0] sm:$0xff] %v278
                  %v280 = vld [vmem:[%s232 + $0x138] sm:$0xff]
                  %281 = vst [vmem:[%s233 + $0xb8] sm:$0xff] %v280
                  %v282 = vld [vmem:[%s232 + $0x140] sm:$0xff]
                  %283 = vst [vmem:[%s233 + $0xc0] sm:$0xff] %v282
                  %v284 = vld [vmem:[%s232 + $0x148] sm:$0xff]
                  %285 = vst [vmem:[%s233 + $0xc8] sm:$0xff] %v284
                  %v286 = vld [vmem:[%s232 + $0x150] sm:$0xff]
                  %287 = vst [vmem:[%s233 + $0xd0] sm:$0xff] %v286
                  %v288 = vld [vmem:[%s232 + $0x158] sm:$0xff]
                  %289 = vst [vmem:[%s233 + $0xd8] sm:$0xff] %v288
                  %v290 = vld [vmem:[%s232 + $0x160] sm:$0xff]
                  %291 = vst [vmem:[%s233 + $0xe0] sm:$0xff] %v290
                  %v292 = vld [vmem:[%s232 + $0x168] sm:$0xff]
                  %293 = vst [vmem:[%s233 + $0xe8] sm:$0xff] %v292
                  %v294 = vld [vmem:[%s232 + $0x170] sm:$0xff]
                  %295 = vst [vmem:[%s233 + $0xf0] sm:$0xff] %v294
                  %v296 = vld [vmem:[%s232 + $0x178] sm:$0xff]
                  %297 = vst [vmem:[%s233 + $0xf8] sm:$0xff] %v296
                $region52: #{tpu_custom_call.1} parent=46 // loop_footer
                  %s231 = sadd.s32 1, %s227
                $region53: #{tpu_custom_call.1} parent=46 // loop_footer_branch
                  %226 = sbr.rel target = $region49
                $region54: #{tpu_custom_call.1} parent=46 // loop_exit
                  _
              $region47: #{tpu_custom_call.1} parent=31 // pred_fallthru
                _
              // Predicated region
              $region55: #{tpu_custom_call.1} parent=31 // pred_check
                _
              $region56: #{tpu_custom_call.1} parent=31 // pred_check_branch
                %299 = sbr.rel target = $region58
              $region57: #{tpu_custom_call.1} parent=31 // pred_region
                _
              $region58: #{tpu_custom_call.1} parent=31 // pred_fallthru
                _
            $region32: #{tpu_custom_call.1} parent=27 // pred_fallthru
              _
            // Predicated region
            $region33: #{tpu_custom_call.1} parent=27 // pred_check
              _
            $region34: #{tpu_custom_call.1} parent=27 // pred_check_branch
              %149 = sbr.rel target = $region36
            $region35: #{tpu_custom_call.1} parent=27 // pred_region
              %s151 = ssub.s32 256, 1
              loop: start=0, step=1, limit=1
              $region37: #{tpu_custom_call.1} parent=35 // loop_pre_header
                _
              $region38: #{tpu_custom_call.1} parent=35 // loop_header
                %s153 = sphi 0, %s157
                %p154 = scmp.ge.s32.totalorder %s153, 1
                %s158 = sphi %s143, %s143
                %s159 = sphi %s137, %s137
              $region39: #{tpu_custom_call.1} parent=35 // loop_header_branch
                %156 = sbr.rel (%p154) target = $region43
              $region40: #{tpu_custom_call.1} parent=35 // loop_body
                %v160 = vld [vmem:[%s158] sm:%s151]
                %161 = vst [vmem:[%s159] sm:%s151] %v160
                %v162 = vld [vmem:[%s158 + $0x8] sm:%s151]
                %163 = vst [vmem:[%s159 + $0x8] sm:%s151] %v162
                %v164 = vld [vmem:[%s158 + $0x10] sm:%s151]
                %165 = vst [vmem:[%s159 + $0x10] sm:%s151] %v164
                %v166 = vld [vmem:[%s158 + $0x18] sm:%s151]
                %167 = vst [vmem:[%s159 + $0x18] sm:%s151] %v166
                %v168 = vld [vmem:[%s158 + $0x20] sm:%s151]
                %169 = vst [vmem:[%s159 + $0x20] sm:%s151] %v168
                %v170 = vld [vmem:[%s158 + $0x28] sm:%s151]
                %171 = vst [vmem:[%s159 + $0x28] sm:%s151] %v170
                %v172 = vld [vmem:[%s158 + $0x30] sm:%s151]
                %173 = vst [vmem:[%s159 + $0x30] sm:%s151] %v172
                %v174 = vld [vmem:[%s158 + $0x38] sm:%s151]
                %175 = vst [vmem:[%s159 + $0x38] sm:%s151] %v174
                %v176 = vld [vmem:[%s158 + $0x40] sm:%s151]
                %177 = vst [vmem:[%s159 + $0x40] sm:%s151] %v176
                %v178 = vld [vmem:[%s158 + $0x48] sm:%s151]
                %179 = vst [vmem:[%s159 + $0x48] sm:%s151] %v178
                %v180 = vld [vmem:[%s158 + $0x50] sm:%s151]
                %181 = vst [vmem:[%s159 + $0x50] sm:%s151] %v180
                %v182 = vld [vmem:[%s158 + $0x58] sm:%s151]
                %183 = vst [vmem:[%s159 + $0x58] sm:%s151] %v182
                %v184 = vld [vmem:[%s158 + $0x60] sm:%s151]
                %185 = vst [vmem:[%s159 + $0x60] sm:%s151] %v184
                %v186 = vld [vmem:[%s158 + $0x68] sm:%s151]
                %187 = vst [vmem:[%s159 + $0x68] sm:%s151] %v186
                %v188 = vld [vmem:[%s158 + $0x70] sm:%s151]
                %189 = vst [vmem:[%s159 + $0x70] sm:%s151] %v188
                %v190 = vld [vmem:[%s158 + $0x78] sm:%s151]
                %191 = vst [vmem:[%s159 + $0x78] sm:%s151] %v190
                %v192 = vld [vmem:[%s158 + $0x100] sm:%s151]
                %193 = vst [vmem:[%s159 + $0x80] sm:%s151] %v192
                %v194 = vld [vmem:[%s158 + $0x108] sm:%s151]
                %195 = vst [vmem:[%s159 + $0x88] sm:%s151] %v194
                %v196 = vld [vmem:[%s158 + $0x110] sm:%s151]
                %197 = vst [vmem:[%s159 + $0x90] sm:%s151] %v196
                %v198 = vld [vmem:[%s158 + $0x118] sm:%s151]
                %199 = vst [vmem:[%s159 + $0x98] sm:%s151] %v198
                %v200 = vld [vmem:[%s158 + $0x120] sm:%s151]
                %201 = vst [vmem:[%s159 + $0xa0] sm:%s151] %v200
                %v202 = vld [vmem:[%s158 + $0x128] sm:%s151]
                %203 = vst [vmem:[%s159 + $0xa8] sm:%s151] %v202
                %v204 = vld [vmem:[%s158 + $0x130] sm:%s151]
                %205 = vst [vmem:[%s159 + $0xb0] sm:%s151] %v204
                %v206 = vld [vmem:[%s158 + $0x138] sm:%s151]
                %207 = vst [vmem:[%s159 + $0xb8] sm:%s151] %v206
                %v208 = vld [vmem:[%s158 + $0x140] sm:%s151]
                %209 = vst [vmem:[%s159 + $0xc0] sm:%s151] %v208
                %v210 = vld [vmem:[%s158 + $0x148] sm:%s151]
                %211 = vst [vmem:[%s159 + $0xc8] sm:%s151] %v210
                %v212 = vld [vmem:[%s158 + $0x150] sm:%s151]
                %213 = vst [vmem:[%s159 + $0xd0] sm:%s151] %v212
                %v214 = vld [vmem:[%s158 + $0x158] sm:%s151]
                %215 = vst [vmem:[%s159 + $0xd8] sm:%s151] %v214
                %v216 = vld [vmem:[%s158 + $0x160] sm:%s151]
                %217 = vst [vmem:[%s159 + $0xe0] sm:%s151] %v216
                %v218 = vld [vmem:[%s158 + $0x168] sm:%s151]
                %219 = vst [vmem:[%s159 + $0xe8] sm:%s151] %v218
                %v220 = vld [vmem:[%s158 + $0x170] sm:%s151]
                %221 = vst [vmem:[%s159 + $0xf0] sm:%s151] %v220
                %v222 = vld [vmem:[%s158 + $0x178] sm:%s151]
                %223 = vst [vmem:[%s159 + $0xf8] sm:%s151] %v222
              $region41: #{tpu_custom_call.1} parent=35 // loop_footer
                %s157 = sadd.s32 1, %s153
              $region42: #{tpu_custom_call.1} parent=35 // loop_footer_branch
                %152 = sbr.rel target = $region38
              $region43: #{tpu_custom_call.1} parent=35 // loop_exit
                _
            $region36: #{tpu_custom_call.1} parent=27 // pred_fallthru
              _
          $region28: #{tpu_custom_call.1} parent=23 // pred_fallthru
            _
          %300 = vnop
        $region24: #{tpu_custom_call.1} parent=19 // pred_fallthru
          _
      $region20: #{tpu_custom_call.1} parent=5 // pred_fallthru
        _
      %p301 = scmp.le.s32.totalorder 1, %s11
      %p302 = scmp.lt.s32.totalorder %s11, 3
      %p303 = pnand %p301, %p302
      %p304 = pneg %p303
      // Predicated region
      $region59: #{tpu_custom_call.1} parent=5 // pred_check
        _
      $region60: #{tpu_custom_call.1} parent=5 // pred_check_branch
        %306 = sbr.rel (%p303) target = $region62
      $region61: #{tpu_custom_call.1} parent=5 // pred_region
        %s307 = ssub.s32 %s11, 1
        %s308 = sand.u32 %s38, 1
        %s309 = sand.u32 %s38, 1
        %s310 = smul.addr %s309, 256
        %s311 = scalar_lea.vmem [#allocation2], %s310
        // Predicated region
        $region63: #{tpu_custom_call.1} parent=61 // pred_check
          %p312 = pneg %p51
        $region64: #{tpu_custom_call.1} parent=61 // pred_check_branch
          %314 = sbr.rel (%p312) target = $region66
        $region65: #{tpu_custom_call.1} parent=61 // pred_region
          _
        $region66: #{tpu_custom_call.1} parent=61 // pred_fallthru
          _
        %s315 = sand.u32 %s38, 1
        %s316 = sand.u32 %s38, 1
        %s317 = smul.addr %s316, 256
        %s318 = scalar_lea.vmem [#allocation2], %s317
        %p319 = pneg %p51
        %p320 = pneg %p48
        %p321 = scmp.lt.s32.totalorder %s20, 0
        %s322 = scalar_select %p321, %s20, 0
        %s323 = smul.addr %s322, 2
        %s324 = scalar_lea.vmem %s1, %s323
        %p325 = pneg %p77
        %p326 = pneg %p74
        %p327 = pneg %p105
        %p328 = pneg %p102
        %s329 = sand.u32 %s92, 1
        %s330 = scalar_lea.sflag [#allocation4], %s329
        %s331 = sand.u32 %s92, 1
        %s332 = smul.addr %s331, 2
        %s333 = scalar_lea.vmem [#allocation3], %s332
        %s334 = smul.u32 2, %s20
        %s335 = smul.u32 16, %s21
        %p336 = scmp.lt.s32.totalorder %s20, 0
        %s337 = scalar_select %p336, %s20, 0
        %s338 = smul.addr %s337, 2
        %s339 = scalar_lea.vmem %s1, %s338
        %v340 = vld [vmem:[%s311] sm:$0xff]
        %v341 = vld [vmem:[%s311 + $0x8] sm:$0xff]
        %v342 = vld [vmem:[%s311 + $0x10] sm:$0xff]
        %v343 = vld [vmem:[%s311 + $0x18] sm:$0xff]
        %v344 = vld [vmem:[%s311 + $0x20] sm:$0xff]
        %v345 = vld [vmem:[%s311 + $0x28] sm:$0xff]
        %v346 = vld [vmem:[%s311 + $0x30] sm:$0xff]
        %v347 = vld [vmem:[%s311 + $0x38] sm:$0xff]
        %v348 = vld [vmem:[%s311 + $0x40] sm:$0xff]
        %v349 = vld [vmem:[%s311 + $0x48] sm:$0xff]
        %v350 = vld [vmem:[%s311 + $0x50] sm:$0xff]
        %v351 = vld [vmem:[%s311 + $0x58] sm:$0xff]
        %v352 = vld [vmem:[%s311 + $0x60] sm:$0xff]
        %v353 = vld [vmem:[%s311 + $0x68] sm:$0xff]
        %v354 = vld [vmem:[%s311 + $0x70] sm:$0xff]
        %v355 = vld [vmem:[%s311 + $0x78] sm:$0xff]
        %v356 = vld [vmem:[%s311 + $0x80] sm:$0xff]
        %v357 = vld [vmem:[%s311 + $0x88] sm:$0xff]
        %v358 = vld [vmem:[%s311 + $0x90] sm:$0xff]
        %v359 = vld [vmem:[%s311 + $0x98] sm:$0xff]
        %v360 = vld [vmem:[%s311 + $0xa0] sm:$0xff]
        %v361 = vld [vmem:[%s311 + $0xa8] sm:$0xff]
        %v362 = vld [vmem:[%s311 + $0xb0] sm:$0xff]
        %v363 = vld [vmem:[%s311 + $0xb8] sm:$0xff]
        %v364 = vld [vmem:[%s311 + $0xc0] sm:$0xff]
        %v365 = vld [vmem:[%s311 + $0xc8] sm:$0xff]
        %v366 = vld [vmem:[%s311 + $0xd0] sm:$0xff]
        %v367 = vld [vmem:[%s311 + $0xd8] sm:$0xff]
        %v368 = vld [vmem:[%s311 + $0xe0] sm:$0xff]
        %v369 = vld [vmem:[%s311 + $0xe8] sm:$0xff]
        %v370 = vld [vmem:[%s311 + $0xf0] sm:$0xff]
        %v371 = vld [vmem:[%s311 + $0xf8] sm:$0xff]
        %v372 = vld [vmem:[%s339] sm:$0x3]
        %v374 = vrot.slane %v372, 1
        %v375 = vperm.slane %v372, 0
        %v376 = vperm.slane %v374, 0
        %v379 = vmul.f32 %v340, %v375
        %v380 = vmul.f32 %v341, %v375
        %v381 = vmul.f32 %v342, %v375
        %v382 = vmul.f32 %v343, %v375
        %v383 = vmul.f32 %v344, %v375
        %v384 = vmul.f32 %v345, %v375
        %v385 = vmul.f32 %v346, %v375
        %v386 = vmul.f32 %v347, %v375
        %v387 = vmul.f32 %v348, %v375
        %v388 = vmul.f32 %v349, %v375
        %v389 = vmul.f32 %v350, %v375
        %v390 = vmul.f32 %v351, %v375
        %v391 = vmul.f32 %v352, %v375
        %v392 = vmul.f32 %v353, %v375
        %v393 = vmul.f32 %v354, %v375
        %v394 = vmul.f32 %v355, %v375
        %v395 = vmul.f32 %v356, %v376
        %v396 = vmul.f32 %v357, %v376
        %v397 = vmul.f32 %v358, %v376
        %v398 = vmul.f32 %v359, %v376
        %v399 = vmul.f32 %v360, %v376
        %v400 = vmul.f32 %v361, %v376
        %v401 = vmul.f32 %v362, %v376
        %v402 = vmul.f32 %v363, %v376
        %v403 = vmul.f32 %v364, %v376
        %v404 = vmul.f32 %v365, %v376
        %v405 = vmul.f32 %v366, %v376
        %v406 = vmul.f32 %v367, %v376
        %v407 = vmul.f32 %v368, %v376
        %v408 = vmul.f32 %v369, %v376
        %v409 = vmul.f32 %v370, %v376
        %v410 = vmul.f32 %v371, %v376
        %vm411 = vcmask 523264
        %v412 = vsel %vm411, %v379, 0.0
        %413 = vadd.xlane.f32.xlu0 %v412
        %v414 = vpop.xlane.xlu0 %413
        %v415 = vsel %vm411, %v380, 0.0
        %416 = vadd.xlane.f32.xlu0 %v415
        %v417 = vpop.xlane.xlu0 %416
        %v418 = vsel %vm411, %v381, 0.0
        %419 = vadd.xlane.f32.xlu0 %v418
        %v420 = vpop.xlane.xlu0 %419
        %v421 = vsel %vm411, %v382, 0.0
        %422 = vadd.xlane.f32.xlu0 %v421
        %v423 = vpop.xlane.xlu0 %422
        %v424 = vsel %vm411, %v383, 0.0
        %425 = vadd.xlane.f32.xlu0 %v424
        %v426 = vpop.xlane.xlu0 %425
        %v427 = vsel %vm411, %v384, 0.0
        %428 = vadd.xlane.f32.xlu0 %v427
        %v429 = vpop.xlane.xlu0 %428
        %v430 = vsel %vm411, %v385, 0.0
        %431 = vadd.xlane.f32.xlu0 %v430
        %v432 = vpop.xlane.xlu0 %431
        %v433 = vsel %vm411, %v386, 0.0
        %434 = vadd.xlane.f32.xlu0 %v433
        %v435 = vpop.xlane.xlu0 %434
        %v436 = vsel %vm411, %v387, 0.0
        %437 = vadd.xlane.f32.xlu0 %v436
        %v438 = vpop.xlane.xlu0 %437
        %v439 = vsel %vm411, %v388, 0.0
        %440 = vadd.xlane.f32.xlu0 %v439
        %v441 = vpop.xlane.xlu0 %440
        %v442 = vsel %vm411, %v389, 0.0
        %443 = vadd.xlane.f32.xlu0 %v442
        %v444 = vpop.xlane.xlu0 %443
        %v445 = vsel %vm411, %v390, 0.0
        %446 = vadd.xlane.f32.xlu0 %v445
        %v447 = vpop.xlane.xlu0 %446
        %v448 = vsel %vm411, %v391, 0.0
        %449 = vadd.xlane.f32.xlu0 %v448
        %v450 = vpop.xlane.xlu0 %449
        %v451 = vsel %vm411, %v392, 0.0
        %452 = vadd.xlane.f32.xlu0 %v451
        %v453 = vpop.xlane.xlu0 %452
        %v454 = vsel %vm411, %v393, 0.0
        %455 = vadd.xlane.f32.xlu0 %v454
        %v456 = vpop.xlane.xlu0 %455
        %v457 = vsel %vm411, %v394, 0.0
        %458 = vadd.xlane.f32.xlu0 %v457
        %v459 = vpop.xlane.xlu0 %458
        %v460 = vsel %vm411, %v395, 0.0
        %461 = vadd.xlane.f32.xlu0 %v460
        %v462 = vpop.xlane.xlu0 %461
        %v463 = vsel %vm411, %v396, 0.0
        %464 = vadd.xlane.f32.xlu0 %v463
        %v465 = vpop.xlane.xlu0 %464
        %v466 = vsel %vm411, %v397, 0.0
        %467 = vadd.xlane.f32.xlu0 %v466
        %v468 = vpop.xlane.xlu0 %467
        %v469 = vsel %vm411, %v398, 0.0
        %470 = vadd.xlane.f32.xlu0 %v469
        %v471 = vpop.xlane.xlu0 %470
        %v472 = vsel %vm411, %v399, 0.0
        %473 = vadd.xlane.f32.xlu0 %v472
        %v474 = vpop.xlane.xlu0 %473
        %v475 = vsel %vm411, %v400, 0.0
        %476 = vadd.xlane.f32.xlu0 %v475
        %v477 = vpop.xlane.xlu0 %476
        %v478 = vsel %vm411, %v401, 0.0
        %479 = vadd.xlane.f32.xlu0 %v478
        %v480 = vpop.xlane.xlu0 %479
        %v481 = vsel %vm411, %v402, 0.0
        %482 = vadd.xlane.f32.xlu0 %v481
        %v483 = vpop.xlane.xlu0 %482
        %v484 = vsel %vm411, %v403, 0.0
        %485 = vadd.xlane.f32.xlu0 %v484
        %v486 = vpop.xlane.xlu0 %485
        %v487 = vsel %vm411, %v404, 0.0
        %488 = vadd.xlane.f32.xlu0 %v487
        %v489 = vpop.xlane.xlu0 %488
        %v490 = vsel %vm411, %v405, 0.0
        %491 = vadd.xlane.f32.xlu0 %v490
        %v492 = vpop.xlane.xlu0 %491
        %v493 = vsel %vm411, %v406, 0.0
        %494 = vadd.xlane.f32.xlu0 %v493
        %v495 = vpop.xlane.xlu0 %494
        %v496 = vsel %vm411, %v407, 0.0
        %497 = vadd.xlane.f32.xlu0 %v496
        %v498 = vpop.xlane.xlu0 %497
        %v499 = vsel %vm411, %v408, 0.0
        %500 = vadd.xlane.f32.xlu0 %v499
        %v501 = vpop.xlane.xlu0 %500
        %v502 = vsel %vm411, %v409, 0.0
        %503 = vadd.xlane.f32.xlu0 %v502
        %v504 = vpop.xlane.xlu0 %503
        %v505 = vsel %vm411, %v410, 0.0
        %506 = vadd.xlane.f32.xlu0 %v505
        %v507 = vpop.xlane.xlu0 %506
        %v540 = vlaneseq
        %v541 = vand.u32 %v540, 127
        %v542 = vperm.slane %v414, %v541
        %v543 = vadd.s32 %v541, 4294967288
        %v544 = vperm.slane %v417, %v543
        %vm545 = vcmask 130112
        %v546 = vsel %vm545, %v544, %v542
        %v547 = vadd.s32 %v541, 4294967280
        %v548 = vperm.slane %v420, %v547
        %vm549 = vcmask 195712
        %v550 = vsel %vm549, %v548, %v546
        %v551 = vadd.s32 %v541, 4294967272
        %v552 = vperm.slane %v423, %v551
        %vm553 = vcmask 261312
        %v554 = vsel %vm553, %v552, %v550
        %v555 = vadd.s32 %v541, 4294967264
        %v556 = vperm.slane %v426, %v555
        %vm557 = vcmask 326912
        %v558 = vsel %vm557, %v556, %v554
        %v559 = vadd.s32 %v541, 4294967256
        %v560 = vperm.slane %v429, %v559
        %vm561 = vcmask 392512
        %v562 = vsel %vm561, %v560, %v558
        %v563 = vadd.s32 %v541, 4294967248
        %v564 = vperm.slane %v432, %v563
        %vm565 = vcmask 458112
        %v566 = vsel %vm565, %v564, %v562
        %v567 = vadd.s32 %v541, 4294967240
        %v568 = vperm.slane %v435, %v567
        %vm569 = vcmask 523712
        %v570 = vsel %vm569, %v568, %v566
        %v571 = vadd.s32 %v541, 4294967232
        %v572 = vperm.slane %v438, %v571
        %vm573 = vcmask 589312
        %v574 = vsel %vm573, %v572, %v570
        %v575 = vadd.s32 %v541, 4294967224
        %v576 = vperm.slane %v441, %v575
        %vm577 = vcmask 654912
        %v578 = vsel %vm577, %v576, %v574
        %v579 = vadd.s32 %v541, 4294967216
        %v580 = vperm.slane %v444, %v579
        %vm581 = vcmask 720512
        %v582 = vsel %vm581, %v580, %v578
        %v583 = vadd.s32 %v541, 4294967208
        %v584 = vperm.slane %v447, %v583
        %vm585 = vcmask 786112
        %v586 = vsel %vm585, %v584, %v582
        %v587 = vadd.s32 %v541, 4294967200
        %v588 = vperm.slane %v450, %v587
        %vm589 = vcmask 851712
        %v590 = vsel %vm589, %v588, %v586
        %v591 = vadd.s32 %v541, 4294967192
        %v592 = vperm.slane %v453, %v591
        %vm593 = vcmask 917312
        %v594 = vsel %vm593, %v592, %v590
        %v595 = vadd.s32 %v541, 4294967184
        %v596 = vperm.slane %v456, %v595
        %vm597 = vcmask 982912
        %v598 = vsel %vm597, %v596, %v594
        %v599 = vadd.s32 %v541, 4294967176
        %v600 = vperm.slane %v459, %v599
        %vm601 = vcmask 1048512
        %v602 = vsel %vm601, %v600, %v598
        %v603 = vperm.slane %v462, %v541
        %v604 = vperm.slane %v465, %v543
        %v605 = vsel %vm545, %v604, %v603
        %v606 = vperm.slane %v468, %v547
        %v607 = vsel %vm549, %v606, %v605
        %v608 = vperm.slane %v471, %v551
        %v609 = vsel %vm553, %v608, %v607
        %v610 = vperm.slane %v474, %v555
        %v611 = vsel %vm557, %v610, %v609
        %v612 = vperm.slane %v477, %v559
        %v613 = vsel %vm561, %v612, %v611
        %v614 = vperm.slane %v480, %v563
        %v615 = vsel %vm565, %v614, %v613
        %v616 = vperm.slane %v483, %v567
        %v617 = vsel %vm569, %v616, %v615
        %v618 = vperm.slane %v486, %v571
        %v619 = vsel %vm573, %v618, %v617
        %v620 = vperm.slane %v489, %v575
        %v621 = vsel %vm577, %v620, %v619
        %v622 = vperm.slane %v492, %v579
        %v623 = vsel %vm581, %v622, %v621
        %v624 = vperm.slane %v495, %v583
        %v625 = vsel %vm585, %v624, %v623
        %v626 = vperm.slane %v498, %v587
        %v627 = vsel %vm589, %v626, %v625
        %v628 = vperm.slane %v501, %v591
        %v629 = vsel %vm593, %v628, %v627
        %v630 = vperm.slane %v504, %v595
        %v631 = vsel %vm597, %v630, %v629
        %v632 = vperm.slane %v507, %v599
        %v633 = vsel %vm601, %v632, %v631
        %vm634 = vcmask 1041409
        %v635 = vsel %vm634, %v633, %v602
        %637 = vst [vmem:[%s333] sm:$0x3] %v635
        %s638 = sand.u32 %s92, 1
        %s639 = scalar_lea.sflag [#allocation4], %s638
        %s640 = sand.u32 %s92, 1
        %s641 = smul.addr %s640, 2
        %s642 = scalar_lea.vmem [#allocation3], %s641
        // Predicated region
        $region67: #{tpu_custom_call.1} parent=61 // pred_check
          %p643 = pneg %p102
        $region68: #{tpu_custom_call.1} parent=61 // pred_check_branch
          %645 = sbr.rel (%p643) target = $region70
        $region69: #{tpu_custom_call.1} parent=61 // pred_region
          %647 = vsyncadd %s639, 0
          %s648 = smul.addr %s20, 2
          %s649 = sadd.s32 %s21, %s648
          %s650 = smul.addr %s649, 2
          %s651 = scalar_lea.hbm %s2, %s650
          %s653 = sshll.u32 %s642, 4
          %s654 = int_to_ptr.vmem [resolvable:$true] %s653
          %s655 = sshll.u32 %s651, 4
          %s656 = int_to_ptr.hbm [resolvable:$true] %s655
          %658 = dma.vmem_to_hbm [thread:$0]  %s654, 32, %s656, %s639
        $region70: #{tpu_custom_call.1} parent=61 // pred_fallthru
          _
      $region62: #{tpu_custom_call.1} parent=5 // pred_fallthru
        _
      %p659 = scmp.le.s32.totalorder 2, %s11
      // Predicated region
      $region71: #{tpu_custom_call.1} parent=5 // pred_check
        %p660 = pneg %p659
      $region72: #{tpu_custom_call.1} parent=5 // pred_check_branch
        %662 = sbr.rel (%p660) target = $region74
      $region73: #{tpu_custom_call.1} parent=5 // pred_region
        %s663 = ssub.s32 %s11, 2
        // Predicated region
        $region75: #{tpu_custom_call.1} parent=73 // pred_check
          %p664 = pneg %p108
        $region76: #{tpu_custom_call.1} parent=73 // pred_check_branch
          %666 = sbr.rel (%p664) target = $region78
        $region77: #{tpu_custom_call.1} parent=73 // pred_region
          %s667 = sand.u32 %s93, 1
          %s668 = scalar_lea.sflag [#allocation4], %s667
          %s669 = sand.u32 %s93, 1
          %s670 = smul.addr %s669, 2
          %s671 = scalar_lea.vmem [#allocation3], %s670
          %673 = dma.done %s668, 32
        $region78: #{tpu_custom_call.1} parent=73 // pred_fallthru
          _
      $region74: #{tpu_custom_call.1} parent=5 // pred_fallthru
        _
    $region6: #{tpu_custom_call.1} parent=1 // loop_footer
      %s15 = sadd.s32 1, %s11
    $region7: #{tpu_custom_call.1} parent=1 // loop_footer_branch
      %10 = sbr.rel target = $region3
    $region8: #{tpu_custom_call.1} parent=1 // loop_exit
      _
    %674 = vsyncpa [#allocation4], 1
    %s675 = scalar_lea.sflag [#allocation4], 1
    %676 = vsyncpa %s675, 1

</llo_original>
